<compile_context>
chip_gen: v7x
topology: tpu7x:2x2x1
jax: 0.10.0
libtpu: 0.0.40
codegen_flags: <defaults>
</compile_context>

<pallas_src>
import functools

import jax
import jax.numpy as jnp
from jax import lax
from jax.experimental import pallas as pl
from jax.experimental.pallas import tpu as pltpu


# --------------------------------------------------------------------------
# small helpers
# --------------------------------------------------------------------------
_VMEM_LIMIT = None


def _vmem_limit_bytes():
    """Scoped-VMEM request: generous on v5e/v6e (128 MiB), safe on v7x (64 MiB)."""
    try:
        cap = int(pltpu.get_tpu_info().vmem_capacity_bytes)
    except Exception:  # pragma: no cover - conservative fallback
        cap = 64 << 20
    return max(32 << 20, min(cap - (16 << 20), 100 << 20))


def _cparams(dims):
    global _VMEM_LIMIT
    if _VMEM_LIMIT is None:
        _VMEM_LIMIT = _vmem_limit_bytes()
    cls = getattr(pltpu, "CompilerParams", None)
    if cls is None:  # very old jax fallback
        cls = getattr(pltpu, "TPUCompilerParams")
    try:
        return cls(dimension_semantics=tuple(dims), vmem_limit_bytes=_VMEM_LIMIT)
    except TypeError:
        return cls(dimension_semantics=tuple(dims))


def _recip(x):
    if hasattr(pl, "reciprocal"):
        return pl.reciprocal(x, approx=True)
    return 1.0 / x


def _pick_tile(n, cap, mult=8, prefer_split=False):
    """Largest divisor of n that is a multiple of `mult` and <= cap.

    Falls back to the full dimension (always a legal BlockSpec block).  With
    `prefer_split` the tile is additionally capped at n//2 so a parallel grid
    axis keeps >=2 blocks (keeps both v7x TensorCores busy).
    """
    cap = min(cap, n)
    if prefer_split and n >= 2 * mult and (n // 2) % mult == 0:
        cap = min(cap, n // 2)
    for t in range(cap, 0, -1):
        if n % t == 0 and t % mult == 0:
            return t
    return n


def _ln(x, g, b, eps=1e-5):
    mu = jnp.mean(x, axis=-1, keepdims=True)
    var = jnp.mean((x - mu) ** 2, axis=-1, keepdims=True)
    return (x - mu) * lax.rsqrt(var + eps) * g + b


# --------------------------------------------------------------------------
# Pallas kernels
# --------------------------------------------------------------------------
def _preproc_kernel(frames_ref, fb_ref, out_ref):
    # frames_ref: (1, tt, sub*win)   fb_ref: (sub*win, sub*n_mels)  (block-diag)
    # out_ref:    (1, tt, sub*n_mels) bf16  -- lane-dense, subsampled features
    feat = jnp.dot(frames_ref[0], fb_ref[...], preferred_element_type=jnp.float32)
    out_ref[0] = jnp.log(jnp.abs(feat) + 1e-5).astype(out_ref.dtype)


def _dense_kernel(x_ref, w_ref, b_ref, o_ref, acc_ref):
    # tiled (M, K) x (K, N) matmul with f32 accumulator, bias at finalize
    @pl.when(pl.program_id(2) == 0)
    def _():
        acc_ref[...] = jnp.zeros_like(acc_ref)

    x = x_ref[...]
    if x.dtype != jnp.bfloat16:
        x = x.astype(jnp.bfloat16)
    acc_ref[...] += jnp.dot(x, w_ref[...], preferred_element_type=jnp.float32)

    @pl.when(pl.program_id(2) == pl.num_programs(2) - 1)
    def _():
        o_ref[...] = acc_ref[...] + b_ref[...]


def _ffn_kernel(x_ref, g1_ref, b1_ref, w1_ref, c1_ref, w2_ref, c2_ref, *rest,
                scale, final_ln):
    # fused: LN -> W1 -> SiLU -> W2 -> scale*h + residual [-> final LN]
    if final_ln:
        g2_ref, b2_ref, o_ref = rest
    else:
        (o_ref,) = rest

    x = x_ref[...]                                         # (tm, D) f32
    h = _ln(x, g1_ref[...], b1_ref[...])
    y = jnp.dot(h.astype(jnp.bfloat16), w1_ref[...],
                preferred_element_type=jnp.float32) + c1_ref[...]
    y = y * jax.nn.sigmoid(y)                              # SiLU
    y = jnp.dot(y.astype(jnp.bfloat16), w2_ref[...],
                preferred_element_type=jnp.float32) + c2_ref[...]
    out = x + scale * y
    if final_ln:
        out = _ln(out, g2_ref[...], b2_ref[...])
    o_ref[...] = out


def _qkv_kernel(x_ref, g_ref, b_ref, wqkv_ref, cqkv_ref, q_ref, k_ref, v_ref):
    # fused: LN -> single (D, 3D) projection -> lane-aligned q/k/v slices
    d = q_ref.shape[-1]
    h = _ln(x_ref[...], g_ref[...], b_ref[...]).astype(jnp.bfloat16)
    y = jnp.dot(h, wqkv_ref[...], preferred_element_type=jnp.float32) + cqkv_ref[...]
    q_ref[...] = y[:, :d].astype(q_ref.dtype)
    k_ref[...] = y[:, d:2 * d].astype(k_ref.dtype)
    v_ref[...] = y[:, 2 * d:].astype(v_ref.dtype)


def _attn_kernel(lens_ref, q_ref, k_ref, v_ref, res_ref, wo_ref, bo_ref,
                 o_ref, m_sc, l_sc, acc_sc, *, n_heads, scale):
    # flash attention over KV tiles with a lane-dense (tq, D) accumulator,
    # fused output projection + residual add at the last KV tile.
    b = pl.program_id(0)
    ki = pl.program_id(2)
    nk = pl.num_programs(2)

    tq, D = q_ref.shape[1], q_ref.shape[2]
    tk = k_ref.shape[1]
    dh = D // n_heads

    @pl.when(ki == 0)
    def _():
        m_sc[...] = jnp.full_like(m_sc, -jnp.inf)
        l_sc[...] = jnp.zeros_like(l_sc)
        acc_sc[...] = jnp.zeros_like(acc_sc)

    length = lens_ref[b]

    # skip KV tiles that are entirely in the padded region of this batch item
    @pl.when(ki * tk < length)
    def _():
        q = q_ref[0]                                       # (tq, D) bf16
        k = k_ref[0]                                       # (tk, D) bf16
        v = v_ref[0]                                       # (tk, D) bf16

        key_idx = ki * tk + lax.broadcasted_iota(jnp.int32, (tq, tk), 1)
        mask_bias = jnp.where(key_idx < length, 0.0, -1e30)  # (tq, tk) f32

        # TODO(synk): on v6e/v7x a bf16 exp path roughly doubles EUP throughput;
        #             kept in f32 so the same kernel stays fast/correct on v5e.
        for h in range(n_heads):                           # static unroll (small H)
            lo = h * dh
            qh = q[:, lo:lo + dh]
            kh = k[:, lo:lo + dh]
            vh = v[:, lo:lo + dh]
            s = lax.dot_general(qh, kh, (((1,), (1,)), ((), ())),
                                preferred_element_type=jnp.float32)
            s = s * scale + mask_bias

            m_prev = m_sc[:, h:h + 1]                      # (tq, 1)
            m_new = jnp.maximum(m_prev, jnp.max(s, axis=-1, keepdims=True))
            alpha = jnp.exp(m_prev - m_new)
            p = jnp.exp(s - m_new)                         # masked scores -> 0

            l_sc[:, h:h + 1] = alpha * l_sc[:, h:h + 1] + jnp.sum(
                p, axis=-1, keepdims=True)
            acc_sc[:, lo:lo + dh] = alpha * acc_sc[:, lo:lo + dh] + lax.dot_general(
                p.astype(vh.dtype), vh, (((1,), (0,)), ((), ())),
                preferred_element_type=jnp.float32)
            m_sc[:, h:h + 1] = m_new

    @pl.when(ki == nk - 1)
    def _():
        # per-head 1/l normalization written back into the lane-dense accumulator
        for h in range(n_heads):
            lo = h * dh
            l = l_sc[:, h:h + 1]
            inv = jnp.where(l > 0.0, _recip(jnp.where(l > 0.0, l, 1.0)), 0.0)
            acc_sc[:, lo:lo + dh] = acc_sc[:, lo:lo + dh] * inv
        y = jnp.dot(acc_sc[...].astype(jnp.bfloat16), wo_ref[...],
                    preferred_element_type=jnp.float32) + bo_ref[...]
        o_ref[0] = res_ref[0] + y


# --------------------------------------------------------------------------
# pallas_call wrappers
# --------------------------------------------------------------------------
def preprocess(frames, fb_sub, *, t_cap=256):
    """frames: [B, Ts, sub*win] f32 -> log-mel (subsampled) [B, Ts, sub*n_mels] bf16."""
    B, Ts, Wb = frames.shape
    Nb = fb_sub.shape[1]
    tt = _pick_tile(Ts, t_cap, mult=8)
    return pl.pallas_call(
        _preproc_kernel,
        out_shape=jax.ShapeDtypeStruct((B, Ts, Nb), jnp.bfloat16),
        grid=(B, Ts // tt),
        in_specs=[pl.BlockSpec((1, tt, Wb), lambda b, t: (b, t, 0)),
                  pl.BlockSpec((Wb, Nb), lambda b, t: (0, 0))],
        out_specs=pl.BlockSpec((1, tt, Nb), lambda b, t: (b, t, 0)),
        compiler_params=_cparams(("parallel", "parallel")),
    )(frames, fb_sub)


def dense_tiled(x, w, b, *, tm_cap=512, tn_cap=512, tk_cap=512):
    """M/N/K-tiled matmul + bias (bf16 operands, f32 accumulator)."""
    M, K = x.shape
    N = w.shape[1]
    tm = _pick_tile(M, tm_cap, mult=8, prefer_split=True)
    tn = _pick_tile(N, tn_cap, mult=128)
    tk = _pick_tile(K, tk_cap, mult=128)
    return pl.pallas_call(
        _dense_kernel,
        out_shape=jax.ShapeDtypeStruct((M, N), jnp.float32),
        grid=(M // tm, N // tn, K // tk),
        in_specs=[pl.BlockSpec((tm, tk), lambda i, j, kk: (i, kk)),
                  pl.BlockSpec((tk, tn), lambda i, j, kk: (kk, j)),
                  pl.BlockSpec((1, tn), lambda i, j, kk: (0, j))],
        out_specs=pl.BlockSpec((tm, tn), lambda i, j, kk: (i, j)),
        scratch_shapes=[pltpu.VMEM((tm, tn), jnp.float32)],
        compiler_params=_cparams(("parallel", "parallel", "arbitrary")),
    )(x, w, b.reshape(1, N))


def ffn_block(x, g1, b1, w1, c1, w2, c2, *, scale, final_ln=None, tm_cap=512):
    M, D = x.shape
    F = w1.shape[1]
    tm = _pick_tile(M, tm_cap, mult=8, prefer_split=True)
    row = pl.BlockSpec((tm, D), lambda i: (i, 0))
    vd = pl.BlockSpec((1, D), lambda i: (0, 0))
    vf = pl.BlockSpec((1, F), lambda i: (0, 0))
    in_specs = [row, vd, vd,
                pl.BlockSpec((D, F), lambda i: (0, 0)), vf,
                pl.BlockSpec((F, D), lambda i: (0, 0)), vd]
    args = [x, g1.reshape(1, D), b1.reshape(1, D), w1, c1.reshape(1, F),
            w2, c2.reshape(1, D)]
    has_final = final_ln is not None
    if has_final:
        g2, b2 = final_ln
        in_specs += [vd, vd]
        args += [g2.reshape(1, D), b2.reshape(1, D)]
    return pl.pallas_call(
        functools.partial(_ffn_kernel, scale=scale, final_ln=has_final),
        out_shape=jax.ShapeDtypeStruct((M, D), jnp.float32),
        grid=(M // tm,),
        in_specs=in_specs,
        out_specs=row,
        compiler_params=_cparams(("parallel",)),
    )(*args)


def qkv_block(x, g, b, wqkv, bqkv, *, tm_cap=512):
    M, D = x.shape
    tm = _pick_tile(M, tm_cap, mult=8, prefer_split=True)
    row = pl.BlockSpec((tm, D), lambda i: (i, 0))
    vec = pl.BlockSpec((1, D), lambda i: (0, 0))
    out = jax.ShapeDtypeStruct((M, D), jnp.bfloat16)
    return pl.pallas_call(
        _qkv_kernel,
        out_shape=(out, out, out),
        grid=(M // tm,),
        in_specs=[row, vec, vec,
                  pl.BlockSpec((D, 3 * D), lambda i: (0, 0)),
                  pl.BlockSpec((1, 3 * D), lambda i: (0, 0))],
        out_specs=(row, row, row),
        compiler_params=_cparams(("parallel",)),
    )(x, g.reshape(1, D), b.reshape(1, D), wqkv, bqkv.reshape(1, 3 * D))


def attention_block(q, k, v, res, wo, bo, lengths, n_heads,
                    *, tq_cap=256, tk_cap=512):
    B, T, D = q.shape
    dh = D // n_heads
    scale = 1.0 / float(dh) ** 0.5
    tq = _pick_tile(T, tq_cap, mult=8)
    tk = _pick_tile(T, tk_cap, mult=8)

    qmap = lambda b, qi, ki, lens: (b, qi, 0)
    kmap = lambda b, qi, ki, lens: (b, ki, 0)
    wmap = lambda b, qi, ki, lens: (0, 0)

    return pl.pallas_call(
        functools.partial(_attn_kernel, n_heads=n_heads, scale=scale),
        out_shape=jax.ShapeDtypeStruct((B, T, D), jnp.float32),
        grid_spec=pltpu.PrefetchScalarGridSpec(
            num_scalar_prefetch=1,
            grid=(B, T // tq, T // tk),
            in_specs=[pl.BlockSpec((1, tq, D), qmap),   # q
                      pl.BlockSpec((1, tk, D), kmap),   # k
                      pl.BlockSpec((1, tk, D), kmap),   # v
                      pl.BlockSpec((1, tq, D), qmap),   # residual
                      pl.BlockSpec((D, D), wmap),       # Wo (bf16)
                      pl.BlockSpec((1, D), wmap)],      # bo
            out_specs=pl.BlockSpec((1, tq, D), qmap),
            scratch_shapes=[pltpu.VMEM((tq, n_heads), jnp.float32),   # m
                            pltpu.VMEM((tq, n_heads), jnp.float32),   # l
                            pltpu.VMEM((tq, D), jnp.float32)]),       # acc
        compiler_params=_cparams(("parallel", "parallel", "arbitrary")),
    )(lengths.astype(jnp.int32), q, k, v, res, wo, bo.reshape(1, D))


# --------------------------------------------------------------------------
# Model: parameters + forward
# --------------------------------------------------------------------------
def init_params(key, *, win=32, n_mels=32, d_model=128, n_heads=4,
                ffn_dim=256, n_blocks=2, sub=4):
    keys = iter(jax.random.split(key, 64))

    def w(shape, scale=0.02):
        # encoder matmul weights live in bf16 (autocast-style)
        return (scale * jax.random.normal(next(keys), shape)).astype(jnp.bfloat16)

    fb = jnp.abs(jax.random.normal(next(keys), (win, n_mels))).astype(jnp.float32)
    # block-diagonal filterbank: fuses stride-`sub` frame stacking into the
    # preprocessor matmul so its output is lane-dense (sub*n_mels lanes).
    fb_sub = jnp.zeros((sub * win, sub * n_mels), jnp.float32)
    for h in range(sub):
        fb_sub = fb_sub.at[h * win:(h + 1) * win,
                           h * n_mels:(h + 1) * n_mels].set(fb)

    params = {
        "mel_fb": fb,
        "mel_fb_sub": fb_sub,
        "w_sub": w((sub * n_mels, d_model)),
        "b_sub": jnp.zeros((d_model,), jnp.float32),
        "blocks": [],
        "sub": sub, "win": win, "hop": win, "n_heads": n_heads,
    }
    for _ in range(n_blocks):
        blk = {
            "ln1_g": jnp.ones((d_model,), jnp.float32),
            "ln1_b": jnp.zeros((d_model,), jnp.float32),
            "ffn1_w1": w((d_model, ffn_dim)), "ffn1_b1": jnp.zeros((ffn_dim,), jnp.float32),
            "ffn1_w2": w((ffn_dim, d_model)), "ffn1_b2": jnp.zeros((d_model,), jnp.float32),
            "ln2_g": jnp.ones((d_model,), jnp.float32),
            "ln2_b": jnp.zeros((d_model,), jnp.float32),
            # fused QKV projection (one (D, 3D) MXU matmul)
            "wqkv": w((d_model, 3 * d_model)),
            "bqkv": jnp.zeros((3 * d_model,), jnp.float32),
            "wo": w((d_model, d_model)), "bo": jnp.zeros((d_model,), jnp.float32),
            "ln3_g": jnp.ones((d_model,), jnp.float32),
            "ln3_b": jnp.zeros((d_model,), jnp.float32),
            "ffn2_w1": w((d_model, ffn_dim)), "ffn2_b1": jnp.zeros((ffn_dim,), jnp.float32),
            "ffn2_w2": w((ffn_dim, d_model)), "ffn2_b2": jnp.zeros((d_model,), jnp.float32),
            "lnf_g": jnp.ones((d_model,), jnp.float32),
            "lnf_b": jnp.zeros((d_model,), jnp.float32),
        }
        params["blocks"].append(blk)
    return params


def conformer_block(x, p, n_heads, lengths):
    B, T, D = x.shape
    M = B * T
    xf = x.reshape(M, D)

    # --- half-step FFN #1 (fused LN + W1 + SiLU + W2 + 0.5*residual) ---
    xf = ffn_block(xf, p["ln1_g"], p["ln1_b"],
                   p["ffn1_w1"], p["ffn1_b1"], p["ffn1_w2"], p["ffn1_b2"],
                   scale=0.5)

    # --- MHSA: fused LN+QKV (single (D,3D) matmul), flash attention + Wo + residual
    q, k, v = qkv_block(xf, p["ln2_g"], p["ln2_b"], p["wqkv"], p["bqkv"])
    x3 = attention_block(q.reshape(B, T, D), k.reshape(B, T, D),
                         v.reshape(B, T, D), xf.reshape(B, T, D),
                         p["wo"], p["bo"], lengths, n_heads)
    xf = x3.reshape(M, D)

    # TODO(synk): Conformer convolution module (pointwise+GLU+depthwise conv) omitted.

    # --- half-step FFN #2 fused with the block-final LayerNorm ---
    xf = ffn_block(xf, p["ln3_g"], p["ln3_b"],
                   p["ffn2_w1"], p["ffn2_b1"], p["ffn2_w2"], p["ffn2_b2"],
                   scale=0.5, final_ln=(p["lnf_g"], p["lnf_b"]))
    return xf.reshape(B, T, D)


def gigaam_forward(params, wav, wav_lengths):
    """wav: [B, S] float32 waveform, wav_lengths: [B] int32 sample counts."""
    B, S = wav.shape
    win, hop, sub = params["win"], params["hop"], params["sub"]

    # --- preprocessor: framing + block-diag filterbank matmul + log (Pallas) ---
    # hop == win (non-overlapping frames); `sub` consecutive frames are packed
    # into one 128-lane row, so the kernel output is already subsampled and
    # lane-dense bf16 — it feeds dense_tiled without any relayout.
    Tf = S // hop
    Ts = Tf // sub
    frames = wav[:, :Ts * sub * win].reshape(B, Ts, sub * win)
    feats = preprocess(frames, params["mel_fb_sub"])        # [B, Ts, sub*n_mels] bf16
    feat_lengths = wav_lengths // hop
    encoded_lengths = feat_lengths // sub

    # --- encoder (bf16 matmuls, f32 accumulate / residual stream) ---
    d_model = params["w_sub"].shape[1]
    x = dense_tiled(feats.reshape(B * Ts, -1),
                    params["w_sub"], params["b_sub"]).reshape(B, Ts, d_model)

    for blk in params["blocks"]:
        x = conformer_block(x, blk, params["n_heads"], encoded_lengths)

    # match PyTorch/NeMo encoder output convention [B, d_model, T_out]
    encoded = jnp.transpose(x, (0, 2, 1))
    return encoded, encoded_lengths


# --------------------------------------------------------------------------
# Driver
# --------------------------------------------------------------------------
if __name__ == "__main__":
    key = jax.random.PRNGKey(0)
    k_wav, _ = jax.random.split(key)

    B, S = 2, 1024                        # small synthetic waveform batch
    wav = jax.random.normal(k_wav, (B, S), dtype=jnp.float32)
    wav_lengths = jnp.array([1024, 768], dtype=jnp.int32)

    params = init_params(jax.random.PRNGKey(42))

    encoded, encoded_lengths = gigaam_forward(params, wav, wav_lengths)
    jax.block_until_ready(encoded)
    jax.block_until_ready(encoded_lengths)

    assert encoded.shape == (B, 128, 8), encoded.shape
    assert encoded_lengths.shape == (B,), encoded_lengths.shape
    assert bool(jnp.all(jnp.isfinite(encoded)))
    print("KERNEL_OK")
</pallas_src>

<mosaic_0001>
module attributes {stable_mosaic.version = 11 : i64} {
  func.func @_preproc_kernel(%arg0: i32, %arg1: i32, %arg2: memref<1x8x128xf32, #tpu.memory_space<vmem>>, %arg3: memref<128x128xf32, #tpu.memory_space<vmem>>, %arg4: memref<1x8x128xbf16, #tpu.memory_space<vmem>>) attributes {dimension_semantics = [#tpu.dimension_semantics<parallel>, #tpu.dimension_semantics<parallel>], iteration_bounds = array<i64: 2, 1>, scalar_prefetch = 0 : i64, scratch_operands = 0 : i64, tpu.core_type = #tpu.core_type<tc>, window_params = [{transform_indices = @transform_0, window_bounds = array<i64: 1, 8, 128>}, {pipeline_mode = #tpu.pipeline_mode<synchronous>, transform_indices = @transform_1, window_bounds = array<i64: 128, 128>}, {transform_indices = @transform_2, window_bounds = array<i64: 1, 8, 128>}]} {
    %c0 = arith.constant 0 : index
    %c0_0 = arith.constant 0 : index
    %c0_1 = arith.constant 0 : index
    %0 = vector.load %arg2[%c0, %c0_0, %c0_1] : memref<1x8x128xf32, #tpu.memory_space<vmem>>, vector<1x8x128xf32>
    %1 = vector.shape_cast %0 : vector<1x8x128xf32> to vector<8x128xf32>
    %c0_2 = arith.constant 0 : index
    %c0_3 = arith.constant 0 : index
    %2 = vector.load %arg3[%c0_2, %c0_3] : memref<128x128xf32, #tpu.memory_space<vmem>>, vector<128x128xf32>
    %cst = arith.constant dense<0.000000e+00> : vector<8x128xf32>
    %3 = tpu.matmul %1, %2, %cst {dimension_numbers = #tpu.dot_dimension_numbers<[1], [0], [0], [1], [0, 0, 1, 1], [], []>} : vector<8x128xf32>, vector<128x128xf32>, vector<8x128xf32> -> vector<8x128xf32>
    %4 = math.absf %3 : vector<8x128xf32>
    %cst_4 = arith.constant 9.99999974E-6 : f32
    %5 = vector.broadcast %cst_4 : f32 to vector<8x128xf32>
    %6 = arith.addf %4, %5 : vector<8x128xf32>
    %7 = math.log %6 : vector<8x128xf32>
    %8 = arith.truncf %7 : vector<8x128xf32> to vector<8x128xbf16>
    %c0_5 = arith.constant 0 : index
    %c0_6 = arith.constant 0 : index
    %c0_7 = arith.constant 0 : index
    %9 = vector.load %arg4[%c0_5, %c0_6, %c0_7] : memref<1x8x128xbf16, #tpu.memory_space<vmem>>, vector<1x8x128xbf16>
    %10 = vector.shape_cast %9 : vector<1x8x128xbf16> to vector<8x128xbf16>
    %11 = vector.shape_cast %8 : vector<8x128xbf16> to vector<1x8x128xbf16>
    tpu.vector_store %arg4[%c0_5, %c0_6, %c0_7], %11 {strides = array<i32>} : memref<1x8x128xbf16, #tpu.memory_space<vmem>>, vector<1x8x128xbf16>,
    return
  }
  func.func @transform_0(%arg0: i32, %arg1: i32) -> (i32, i32, i32) {
    %c0_i32 = arith.constant 0 : i32
    %c0_i32_0 = arith.constant 0 : i32
    return %arg0, %arg1, %c0_i32 : i32, i32, i32
  }
  func.func @transform_1(%arg0: i32, %arg1: i32) -> (i32, i32) {
    %c0_i32 = arith.constant 0 : i32
    %c0_i32_0 = arith.constant 0 : i32
    %c0_i32_1 = arith.constant 0 : i32
    return %c0_i32, %c0_i32_0 : i32, i32
  }
  func.func @transform_2(%arg0: i32, %arg1: i32) -> (i32, i32, i32) {
    %c0_i32 = arith.constant 0 : i32
    %c0_i32_0 = arith.constant 0 : i32
    return %arg0, %arg1, %c0_i32 : i32, i32, i32
  }
}

</mosaic_0001>

<llo_original>
// kernel: tpu_custom_call.1
$region0: #{tpu_custom_call.1}
  #allocation0 [shape = 'u32[]', space=smem, size = 0x4, offset = 0x4, fixed_abs, tag = 'smem constant byte address 0x4 - core index']
  #allocation1 [shape = 'u32[144,128]{1,0:T(1,128)}', space=vmem, size = 0x12000, scoped, tag = 'internal scratch']
  %s0 = inlined_call_operand.hbm [shape: f32[2,8,128], index: 0, kind: input, shape index: {}]
  %s1 = inlined_call_operand.hbm [shape: f32[128,128], index: 1, kind: input, shape index: {}]
  %s2 = inlined_call_operand.hbm [shape: bf16[2,8,128], index: 2, kind: output, shape index: {}]
  %s3 = sld [smem:[#allocation0]]
  $region49: #{tpu_custom_call.1} parent=0
    _
  %s5 = ssub.s32 1, %s3
  %s6 = scalar_select 0, %s5, %s3
  $region1: #{tpu_custom_call.1} parent=0
    #allocation2 [shape = 'u8[8192]{0}', space=vmem, size = 0x2000, scoped, tag = 'input window, operand 0']
    #allocation3 [shape = 's32[2]{0}', space=sflag, size = 0x8, scoped, tag = 'scoped memory for tpu_custom_call.1']
    #allocation4 [shape = 's32[2]{0}', space=sflag, size = 0x8, scoped, tag = 'scoped memory for tpu_custom_call.1']
    #allocation5 [shape = 'u8[65536]{0}', space=vmem, size = 0x10000, scoped, tag = 'input window, operand 1, single buffered']
    #allocation6 [shape = 's32[1]{0}', space=sflag, size = 0x4, scoped, tag = 'scoped memory for tpu_custom_call.1']
    #allocation7 [shape = 'u8[4096]{0}', space=vmem, size = 0x1000, scoped, tag = 'output window, operand 0']
    %7 = vsyncpa [#allocation3], 0
    %s8 = scalar_lea.sflag [#allocation3], 1
    %9 = vsyncpa %s8, 0
    %10 = vsyncpa [#allocation6], 0
    %11 = vsyncpa [#allocation4], 0
    %s12 = scalar_lea.sflag [#allocation4], 1
    %13 = vsyncpa %s12, 0
    loop: start=0, step=1, limit=4
    $region2: #{tpu_custom_call.1} parent=1 // loop_pre_header
      _
    $region3: #{tpu_custom_call.1} parent=1 // loop_header
      %s15 = sphi 0, %s19
      %p16 = scmp.ge.s32.totalorder %s15, 4
      %s22 = sphi 0, %s34
      %s23 = sphi 0, %s30
      %s24 = sphi 0, %s22
      %s25 = sphi 0, %s23
      %s26 = sphi 0, %s24
      %s27 = sphi 0, %s25
      %s39 = sphi 0, %s41
      %s42 = sphi 0, %s39
      %s43 = sphi 0, %s42
      %s59 = sphi 0, %s43
      %s63 = sphi 0, %s63
      %s65 = sphi 0, %s63
      %s66 = sphi 0, %s65
      %s80 = sphi 0, %s66
      %s88 = sphi 0, %s90
      %s91 = sphi 0, %s88
      %s92 = sphi 0, %s91
      %s108 = sphi 0, %s92
    $region4: #{tpu_custom_call.1} parent=1 // loop_header_branch
      %18 = sbr.rel (%p16) target = $region8
    $region5: #{tpu_custom_call.1} parent=1 // loop_body
      %s20 = ssub.s32 %s15, 1
      %s21 = ssub.s32 %s15, 2
      %s28 = sadd.s32 1, %s23
      %p29 = scmp.ge.s32.totalorder %s28, 1
      %s30 = scalar_select %p29, 0, %s28
      %s31 = sadd.s32 1, %s22
      %s32 = scalar_select %p29, %s31, %s22
      %p33 = scmp.ge.s32.totalorder %s32, 2
      %s34 = scalar_select %p33, 0, %s32
      %s35 = ssub.s32 %s22, %s34
      %s36 = ssub.s32 %s23, %s30
      %s37 = sor.u32 %s35, %s36
      %p38 = scmp.eq.s32.totalorder %s37, 0
      %s40 = sadd.s32 %s39, 1
      %s41 = scalar_select %p38, %s39, %s40
      %p44 = pneg %p38
      %p45 = scmp.eq.s32.totalorder %s15, 1
      %p46 = por %p44, %p45
      %p47 = scmp.ne.s32.totalorder %s39, %s42
      %p48 = scmp.eq.s32.totalorder %s15, 0
      %p49 = por %p47, %p48
      %p50 = scmp.ne.s32.totalorder %s39, %s42
      %p51 = scmp.eq.s32.totalorder %s20, 1
      %p52 = por %p50, %p51
      %p53 = scmp.ne.s32.totalorder %s42, %s43
      %p54 = scmp.eq.s32.totalorder %s20, 0
      %p55 = por %p53, %p54
      %p56 = scmp.ne.s32.totalorder %s42, %s43
      %p57 = scmp.eq.s32.totalorder %s21, 1
      %p58 = por %p56, %p57
      %p60 = scmp.ne.s32.totalorder %s43, %s59
      %p61 = scmp.eq.s32.totalorder %s21, 0
      %p62 = por %p60, %p61
      %s64 = sadd.s32 %s63, 1
      %p67 = scmp.eq.s32.totalorder %s15, 1
      %p68 = scmp.ne.s32.totalorder %s63, %s65
      %p69 = scmp.eq.s32.totalorder %s15, 0
      %p70 = por %p68, %p69
      %p71 = scmp.ne.s32.totalorder %s63, %s65
      %p72 = scmp.eq.s32.totalorder %s20, 1
      %p73 = por %p71, %p72
      %p74 = scmp.ne.s32.totalorder %s65, %s66
      %p75 = scmp.eq.s32.totalorder %s20, 0
      %p76 = por %p74, %p75
      %p77 = scmp.ne.s32.totalorder %s65, %s66
      %p78 = scmp.eq.s32.totalorder %s21, 1
      %p79 = por %p77, %p78
      %p81 = scmp.ne.s32.totalorder %s66, %s80
      %p82 = scmp.eq.s32.totalorder %s21, 0
      %p83 = por %p81, %p82
      %s84 = ssub.s32 %s22, %s34
      %s85 = ssub.s32 %s23, %s30
      %s86 = sor.u32 %s84, %s85
      %p87 = scmp.eq.s32.totalorder %s86, 0
      %s89 = sadd.s32 %s88, 1
      %s90 = scalar_select %p87, %s88, %s89
      %p93 = pneg %p87
      %p94 = scmp.eq.s32.totalorder %s15, 1
      %p95 = por %p93, %p94
      %p96 = scmp.ne.s32.totalorder %s88, %s91
      %p97 = scmp.eq.s32.totalorder %s15, 0
      %p98 = por %p96, %p97
      %p99 = scmp.ne.s32.totalorder %s88, %s91
      %p100 = scmp.eq.s32.totalorder %s20, 1
      %p101 = por %p99, %p100
      %p102 = scmp.ne.s32.totalorder %s91, %s92
      %p103 = scmp.eq.s32.totalorder %s20, 0
      %p104 = por %p102, %p103
      %p105 = scmp.ne.s32.totalorder %s91, %s92
      %p106 = scmp.eq.s32.totalorder %s21, 1
      %p107 = por %p105, %p106
      %p109 = scmp.ne.s32.totalorder %s92, %s108
      %p110 = scmp.eq.s32.totalorder %s21, 0
      %p111 = por %p109, %p110
      %p112 = scmp.le.s32.totalorder 1, %s15
      %p113 = scmp.lt.s32.totalorder %s15, 3
      %p114 = pnand %p112, %p113
      %p115 = pneg %p114
      // Predicated region
      $region9: #{tpu_custom_call.1} parent=5 // pred_check
        _
      $region10: #{tpu_custom_call.1} parent=5 // pred_check_branch
        %117 = sbr.rel (%p114) target = $region12
      $region11: #{tpu_custom_call.1} parent=5 // pred_region
        %s118 = ssub.s32 %s15, 1
        // Predicated region
        $region13: #{tpu_custom_call.1} parent=11 // pred_check
          %p119 = pneg %p76
        $region14: #{tpu_custom_call.1} parent=11 // pred_check_branch
          %121 = sbr.rel (%p119) target = $region16
        $region15: #{tpu_custom_call.1} parent=11 // pred_region
          %s123 = ssub.s32 2048, 2048
          %124 = vsyncadd [#allocation6], %s123
          %s125 = sshll.u32 [#allocation5], 4
          %s126 = int_to_ptr.vmem [resolvable:$true] %s125
          %131 = dma.hbm_to_vmem [thread:$0]  %s1, 2048, %s126, [#allocation6], 128, 128, 8
        $region16: #{tpu_custom_call.1} parent=11 // pred_fallthru
          _
      $region12: #{tpu_custom_call.1} parent=5 // pred_fallthru
        _
      %p132 = scmp.lt.s32.totalorder %s15, 2
      // Predicated region
      $region17: #{tpu_custom_call.1} parent=5 // pred_check
        %p133 = pneg %p132
      $region18: #{tpu_custom_call.1} parent=5 // pred_check_branch
        %135 = sbr.rel (%p133) target = $region20
      $region19: #{tpu_custom_call.1} parent=5 // pred_region
        // Predicated region
        $region21: #{tpu_custom_call.1} parent=19 // pred_check
          %p136 = pneg %p49
        $region22: #{tpu_custom_call.1} parent=19 // pred_check_branch
          %138 = sbr.rel (%p136) target = $region24
        $region23: #{tpu_custom_call.1} parent=19 // pred_region
          %s139 = sand.u32 %s39, 1
          %s140 = scalar_lea.sflag [#allocation3], %s139
          %s141 = sand.u32 %s39, 1
          %s142 = smul.addr %s141, 8
          %s143 = scalar_lea.vmem [#allocation2], %s142
          %s145 = ssub.s32 128, 128
          %146 = vsyncadd %s140, %s145
          %s147 = sadd.s32 %s23, %s22
          %s148 = smul.addr %s147, 128
          %s149 = scalar_lea.hbm %s0, %s148
          %s151 = sshll.u32 %s143, 4
          %s152 = int_to_ptr.vmem [resolvable:$true] %s151
          %154 = dma.hbm_to_vmem [thread:$0]  %s149, 128, %s152, %s140
        $region24: #{tpu_custom_call.1} parent=19 // pred_fallthru
          _
      $region20: #{tpu_custom_call.1} parent=5 // pred_fallthru
        _
      %p155 = scmp.le.s32.totalorder 1, %s15
      %p156 = scmp.lt.s32.totalorder %s15, 3
      %p157 = pnand %p155, %p156
      %p158 = pneg %p157
      // Predicated region
      $region25: #{tpu_custom_call.1} parent=5 // pred_check
        _
      $region26: #{tpu_custom_call.1} parent=5 // pred_check_branch
        %160 = sbr.rel (%p157) target = $region28
      $region27: #{tpu_custom_call.1} parent=5 // pred_region
        %s161 = ssub.s32 %s15, 1
        %s162 = sand.u32 %s42, 1
        %s163 = scalar_lea.sflag [#allocation3], %s162
        %s164 = sand.u32 %s42, 1
        %s165 = smul.addr %s164, 8
        %s166 = scalar_lea.vmem [#allocation2], %s165
        // Predicated region
        $region29: #{tpu_custom_call.1} parent=27 // pred_check
          %p167 = pneg %p55
        $region30: #{tpu_custom_call.1} parent=27 // pred_check_branch
          %169 = sbr.rel (%p167) target = $region32
        $region31: #{tpu_custom_call.1} parent=27 // pred_region
          %170 = dma.done %s163, 128
        $region32: #{tpu_custom_call.1} parent=27 // pred_fallthru
          _
        // Predicated region
        $region33: #{tpu_custom_call.1} parent=27 // pred_check
          %p171 = pneg %p76
        $region34: #{tpu_custom_call.1} parent=27 // pred_check_branch
          %173 = sbr.rel (%p171) target = $region36
        $region35: #{tpu_custom_call.1} parent=27 // pred_region
          %174 = dma.done [#allocation6], 2048
        $region36: #{tpu_custom_call.1} parent=27 // pred_fallthru
          _
        %s175 = sand.u32 %s42, 1
        %s176 = scalar_lea.sflag [#allocation3], %s175
        %s177 = sand.u32 %s42, 1
        %s178 = smul.addr %s177, 8
        %s179 = scalar_lea.vmem [#allocation2], %s178
        %p180 = pneg %p55
        %p181 = pneg %p52
        %p182 = pneg %p76
        %p183 = pneg %p73
        %p184 = pneg %p104
        %p185 = pneg %p101
        %s186 = sand.u32 %s91, 1
        %s187 = scalar_lea.sflag [#allocation4], %s186
        %s188 = sand.u32 %s91, 1
        %s189 = smul.addr %s188, 4
        %s190 = scalar_lea.vmem [#allocation7], %s189
        %v191 = vld [vmem:[%s166] sm:$0xff]
        %v192 = vld [vmem:[#allocation5] sm:$0xff]
        %v193 = vld [vmem:[#allocation5 + $0x8] sm:$0xff]
        %v194 = vld [vmem:[#allocation5 + $0x10] sm:$0xff]
        %v195 = vld [vmem:[#allocation5 + $0x18] sm:$0xff]
        %v196 = vld [vmem:[#allocation5 + $0x20] sm:$0xff]
        %v197 = vld [vmem:[#allocation5 + $0x28] sm:$0xff]
        %v198 = vld [vmem:[#allocation5 + $0x30] sm:$0xff]
        %v199 = vld [vmem:[#allocation5 + $0x38] sm:$0xff]
        %v200 = vld [vmem:[#allocation5 + $0x40] sm:$0xff]
        %v201 = vld [vmem:[#allocation5 + $0x48] sm:$0xff]
        %v202 = vld [vmem:[#allocation5 + $0x50] sm:$0xff]
        %v203 = vld [vmem:[#allocation5 + $0x58] sm:$0xff]
        %v204 = vld [vmem:[#allocation5 + $0x60] sm:$0xff]
        %v205 = vld [vmem:[#allocation5 + $0x68] sm:$0xff]
        %v206 = vld [vmem:[#allocation5 + $0x70] sm:$0xff]
        %v207 = vld [vmem:[#allocation5 + $0x78] sm:$0xff]
        %208 = vmatprep.subr.mxu0 0.0
        %209 = vmatpush1.msra.mxu0 %v192
        %210 = vmatprep.subr.mxu0 0.0
        %211 = vmatpush1.msra.mxu0 %v193
        %212 = vmatprep.subr.mxu0 0.0
        %213 = vmatpush1.msra.mxu0 %v194
        %214 = vmatprep.subr.mxu0 0.0
        %215 = vmatpush1.msra.mxu0 %v195
        %216 = vmatprep.subr.mxu0 0.0
        %217 = vmatpush1.msra.mxu0 %v196
        %218 = vmatprep.subr.mxu0 0.0
        %219 = vmatpush1.msra.mxu0 %v197
        %220 = vmatprep.subr.mxu0 0.0
        %221 = vmatpush1.msra.mxu0 %v198
        %222 = vmatprep.subr.mxu0 0.0
        %223 = vmatpush1.msra.mxu0 %v199
        %224 = vmatprep.subr.mxu0 0.0
        %225 = vmatpush1.msra.mxu0 %v200
        %226 = vmatprep.subr.mxu0 0.0
        %227 = vmatpush1.msra.mxu0 %v201
        %228 = vmatprep.subr.mxu0 0.0
        %229 = vmatpush1.msra.mxu0 %v202
        %230 = vmatprep.subr.mxu0 0.0
        %231 = vmatpush1.msra.mxu0 %v203
        %232 = vmatprep.subr.mxu0 0.0
        %233 = vmatpush1.msra.mxu0 %v204
        %234 = vmatprep.subr.mxu0 0.0
        %235 = vmatpush1.msra.mxu0 %v205
        %236 = vmatprep.subr.mxu0 0.0
        %237 = vmatpush1.msra.mxu0 %v206
        %238 = vmatprep.subr.mxu0 0.0
        %239 = vmatpush1.msra.mxu0 %v207
        %240 = vmatprep.subr.mxu0 0.0
        %241 = vmatpush1.msra.mxu0 0.0
        %242 = vmatprep.subr.mxu0 0.0
        %243 = vmatpush1.msra.mxu0 0.0
        %244 = vmatprep.subr.mxu0 0.0
        %245 = vmatpush1.msra.mxu0 0.0
        %246 = vmatprep.subr.mxu0 0.0
        %247 = vmatpush1.msra.mxu0 0.0
        %248 = vmatprep.subr.mxu0 0.0
        %249 = vmatpush1.msra.mxu0 0.0
        %250 = vmatprep.subr.mxu0 0.0
        %251 = vmatpush1.msra.mxu0 0.0
        %252 = vmatprep.subr.mxu0 0.0
        %253 = vmatpush1.msra.mxu0 0.0
        %254 = vmatprep.subr.mxu0 0.0
        %255 = vmatpush1.msra.mxu0 0.0
        %256 = vmatprep.subr.mxu0 0.0
        %257 = vmatpush1.msra.mxu0 0.0
        %258 = vmatprep.subr.mxu0 0.0
        %259 = vmatpush1.msra.mxu0 0.0
        %260 = vmatprep.subr.mxu0 0.0
        %261 = vmatpush1.msra.mxu0 0.0
        %262 = vmatprep.subr.mxu0 0.0
        %263 = vmatpush1.msra.mxu0 0.0
        %264 = vmatprep.subr.mxu0 0.0
        %265 = vmatpush1.msra.mxu0 0.0
        %266 = vmatprep.subr.mxu0 0.0
        %267 = vmatpush1.msra.mxu0 0.0
        %268 = vmatprep.subr.mxu0 0.0
        %269 = vmatpush1.msra.mxu0 0.0
        %270 = vmatprep.subr.mxu0 0.0
        %271 = vmatpush1.msra.mxu0 0.0
        %272 = vmatprep.mubr.f32.mxu0 0.0
        %273 = vmatmul.mubr.f32.gmra.mrb[0].mxu0 %v191
        %v274 = vpop.f32.mrb[0].mxu0
        %v275 = vadd.f32 0.0, %v274
        %v276 = vpop.f32.mrb[0].mxu0
        %277 = vdwg.mxu0
        %v278 = vand.u32 2147483647, %v275
        %v279 = vadd.f32 %v278, 1e-05
        %v280 = vlog2.pop %v279
        %v281 = vmul.f32 %v280, 0.6931472
        %v282 = vpack.c.bf16 %v281, %v281
        %283 = vst [vmem:[%s190] sm:$0xf] %v282
        %s284 = sand.u32 %s91, 1
        %s285 = scalar_lea.sflag [#allocation4], %s284
        %s286 = sand.u32 %s91, 1
        %s287 = smul.addr %s286, 4
        %s288 = scalar_lea.vmem [#allocation7], %s287
        // Predicated region
        $region37: #{tpu_custom_call.1} parent=27 // pred_check
          %p289 = pneg %p101
        $region38: #{tpu_custom_call.1} parent=27 // pred_check_branch
          %291 = sbr.rel (%p289) target = $region40
        $region39: #{tpu_custom_call.1} parent=27 // pred_region
          %s293 = ssub.s32 64, 64
          %294 = vsyncadd %s285, %s293
          %s295 = sadd.s32 %s25, %s24
          %s296 = smul.addr %s295, 64
          %s297 = scalar_lea.hbm %s2, %s296
          %s299 = sshll.u32 %s288, 4
          %s300 = int_to_ptr.vmem [resolvable:$true] %s299
          %302 = dma.vmem_to_hbm [thread:$0]  %s300, 64, %s297, %s285
        $region40: #{tpu_custom_call.1} parent=27 // pred_fallthru
          _
      $region28: #{tpu_custom_call.1} parent=5 // pred_fallthru
        _
      %p303 = scmp.le.s32.totalorder 2, %s15
      // Predicated region
      $region41: #{tpu_custom_call.1} parent=5 // pred_check
        %p304 = pneg %p303
      $region42: #{tpu_custom_call.1} parent=5 // pred_check_branch
        %306 = sbr.rel (%p304) target = $region44
      $region43: #{tpu_custom_call.1} parent=5 // pred_region
        %s307 = ssub.s32 %s15, 2
        // Predicated region
        $region45: #{tpu_custom_call.1} parent=43 // pred_check
          %p308 = pneg %p107
        $region46: #{tpu_custom_call.1} parent=43 // pred_check_branch
          %310 = sbr.rel (%p308) target = $region48
        $region47: #{tpu_custom_call.1} parent=43 // pred_region
          %s311 = sand.u32 %s92, 1
          %s312 = scalar_lea.sflag [#allocation4], %s311
          %s313 = sand.u32 %s92, 1
          %s314 = smul.addr %s313, 4
          %s315 = scalar_lea.vmem [#allocation7], %s314
          %316 = dma.done %s312, 64
        $region48: #{tpu_custom_call.1} parent=43 // pred_fallthru
          _
      $region44: #{tpu_custom_call.1} parent=5 // pred_fallthru
        _
    $region6: #{tpu_custom_call.1} parent=1 // loop_footer
      %s19 = sadd.s32 1, %s15
    $region7: #{tpu_custom_call.1} parent=1 // loop_footer_branch
      %14 = sbr.rel target = $region3
    $region8: #{tpu_custom_call.1} parent=1 // loop_exit
      _
    %317 = vsyncpa [#allocation3], 1
    %s318 = scalar_lea.sflag [#allocation3], 1
    %319 = vsyncpa %s318, 1
    %320 = vsyncpa [#allocation6], 1
    %321 = vsyncpa [#allocation4], 1
    %s322 = scalar_lea.sflag [#allocation4], 1
    %323 = vsyncpa %s322, 1

</llo_original>
